<compile_context>
chip_gen: v7x
topology: tpu7x:2x2x1
jax: 0.10.0
libtpu: 0.0.40
codegen_flags: <defaults>
</compile_context>

<pallas_src>
import jax
import jax.numpy as jnp
from jax.experimental import pallas as pl
from jax.experimental.pallas import tpu as pltpu

# ------------------------------ model config -------------------------------
PATCH = 8      # ViT patch size
D_VIS = 128    # vision hidden dim      (lane-dense: multiple of 128)
D_TXT = 128    # text hidden dim        (lane-dense)
E_DIM = 128    # shared embedding dim   (lane-dense)
VOCAB = 64     # synthetic vocab size
EPS = 1e-12    # L2-norm epsilon


# --------------------------- fused Pallas kernel ----------------------------
def _clip_fused_kernel(scale_ref,            # SMEM (1,)                 f32
                       xv_ref,               # (BN, C*p*p) pooled pixels f32
                       wv_ref, bv_ref,       # (Cpp, E) bf16, (1, E) f32
                       xt_ref,               # (B, Dt) pooled tokens     f32
                       wt_ref, bt_ref,       # (Dt, E) bf16,  (1, E) f32
                       out_ref):             # (B, N)                    f32
    B, N = out_ref.shape

    # ---- vision tower: single folded matmul + bias, L2-normalize -----------
    emb_v = jnp.dot(xv_ref[...].astype(jnp.bfloat16), wv_ref[...],
                    preferred_element_type=jnp.float32) + bv_ref[...]   # (BN, E)
    emb_v = emb_v * jax.lax.rsqrt(
        jnp.sum(emb_v * emb_v, axis=-1, keepdims=True) + EPS)

    # ---- text tower: single folded matmul + bias, L2-normalize, scale ------
    emb_t = jnp.dot(xt_ref[...].astype(jnp.bfloat16), wt_ref[...],
                    preferred_element_type=jnp.float32) + bt_ref[...]   # (B, E)
    emb_t = emb_t * jax.lax.rsqrt(
        jnp.sum(emb_t * emb_t, axis=-1, keepdims=True) + EPS)
    emb_t = emb_t * scale_ref[0]     # fold logit_scale into the B text rows

    # ---- diagonal logits: out[b, n] = <text_b, image_{b,n}> ----------------
    # One VPU multiply + one lane reduce + ONE store (no tiny MXU pushes).
    E = emb_v.shape[-1]
    out_ref[...] = jnp.sum(emb_t[:, None, :] * emb_v.reshape(B, N, E), axis=-1)


def _vmem():
    return pl.BlockSpec(memory_space=pltpu.MemorySpace.VMEM)


def pallas_clip_forward(scale, pooled_v, w_vis, b_vis, pooled_t, w_txt, b_txt,
                        *, B, N):
    # Whole (toy-sized) problem fits one VMEM-resident invocation: no grid.
    return pl.pallas_call(
        _clip_fused_kernel,
        out_shape=jax.ShapeDtypeStruct((B, N), jnp.float32),
        in_specs=[pl.BlockSpec(memory_space=pltpu.MemorySpace.SMEM)]
                 + [_vmem()] * 6,
        out_specs=_vmem(),
    )(scale, pooled_v, w_vis, b_vis, pooled_t, w_txt, b_txt)


# ------------------------------ params --------------------------------------
def init_params(key):
    ks = jax.random.split(key, 6)
    c, p = 3, PATCH
    # Raw two-layer weights for each tower (synthetic, deterministic).
    w_patch = 0.02 * jax.random.normal(ks[0], (c * p * p, D_VIS), jnp.float32)
    b_patch = jnp.zeros((1, D_VIS), jnp.float32)
    w_vproj = 0.05 * jax.random.normal(ks[1], (D_VIS, E_DIM), jnp.float32)
    tok_emb = 0.02 * jax.random.normal(ks[2], (VOCAB, D_TXT), jnp.float32)
    w_txt = 0.05 * jax.random.normal(ks[3], (D_TXT, D_TXT), jnp.float32)
    b_txt = jnp.zeros((1, D_TXT), jnp.float32)
    w_tproj = 0.05 * jax.random.normal(ks[4], (D_TXT, E_DIM), jnp.float32)
    return {
        # Fold the two sequential linears per tower into ONE matmul and store
        # the folded weights in bf16 once (no per-call casts, half the DMA).
        "w_vis": (w_patch @ w_vproj).astype(jnp.bfloat16),   # (C*p*p, E)
        "b_vis": b_patch @ w_vproj,                          # (1, E) f32
        "w_txt": (w_txt @ w_tproj).astype(jnp.bfloat16),     # (Dt, E)
        "b_txt": b_txt @ w_tproj,                            # (1, E) f32
        "tok_emb": tok_emb,                                  # (VOCAB, Dt) f32
        "logit_scale": jnp.array(jnp.log(1.0 / 0.07), jnp.float32),  # CLIP init
    }


# ------------------------------ forward glue ---------------------------------
def clip_zero_shot_forward(params, pixel_values, input_ids, attention_mask):
    B, N, C, H, W = pixel_values.shape
    p = PATCH
    BN = B * N
    Ph, Pw = H // p, W // p
    P = Ph * Pw

    # Mean-pool the patches BEFORE the kernel: pooling commutes with the
    # (linear) patch-embed, so this is exact; it shrinks the kernel DMA P-fold
    # and avoids materializing a transposed (BN, P, C*p*p) copy entirely.
    x = pixel_values.astype(jnp.float32).reshape(BN, C, Ph, p, Pw, p)
    pooled_v = jnp.mean(x, axis=(2, 4)).reshape(BN, C * p * p)        # (BN, Cpp)

    # Text: token-embedding gather + masked mean-pool in the wrapper (XLA);
    # only the pooled (B, Dt) rows enter the kernel.
    # TODO(synk): at toy sizes the gather could be folded into the kernel via
    # scalar prefetch; at real CLIP vocab sizes the table won't fit VMEM.
    tok = params["tok_emb"][input_ids]                                # (B, T, Dt)
    m = attention_mask.astype(jnp.float32)                            # (B, T)
    pooled_t = jnp.sum(tok * m[:, :, None], axis=1) / jnp.maximum(
        jnp.sum(m, axis=1, keepdims=True), 1.0)                       # (B, Dt)

    # HF CLIP effectively operates with exp(logit_scale) capped at 100.
    scale = jnp.minimum(jnp.exp(params["logit_scale"]), 100.0).reshape(1)

    return pallas_clip_forward(
        scale, pooled_v, params["w_vis"], params["b_vis"],
        pooled_t, params["w_txt"], params["b_txt"], B=B, N=N)


# ---------------------------------- main -------------------------------------
if __name__ == "__main__":
    key = jax.random.PRNGKey(0)
    k_param, k_pix, k_ids = jax.random.split(key, 3)

    B, N, C, H, W, T = 2, 4, 3, 16, 16, 8
    params = init_params(k_param)

    pixel_values = jax.random.normal(k_pix, (B, N, C, H, W), jnp.float32)
    input_ids = jax.random.randint(k_ids, (B, T), 0, VOCAB, jnp.int32)
    lengths = jnp.array([T, 5], jnp.int32)
    attention_mask = (jnp.arange(T)[None, :] < lengths[:, None]).astype(jnp.int32)

    out = clip_zero_shot_forward(params, pixel_values, input_ids, attention_mask)
    out = jax.block_until_ready(out)
    assert out.shape == (B, N) and out.dtype == jnp.float32
    print("KERNEL_OK")
</pallas_src>

<mosaic_0001>
module attributes {stable_mosaic.version = 11 : i64} {
  func.func @_clip_fused_kernel(%arg0: memref<1xf32, #tpu.memory_space<smem>>, %arg1: memref<8x192xf32, #tpu.memory_space<vmem>>, %arg2: memref<192x128xbf16, #tpu.memory_space<vmem>>, %arg3: memref<1x128xf32, #tpu.memory_space<vmem>>, %arg4: memref<2x128xf32, #tpu.memory_space<vmem>>, %arg5: memref<128x128xbf16, #tpu.memory_space<vmem>>, %arg6: memref<1x128xf32, #tpu.memory_space<vmem>>, %arg7: memref<2x4xf32, #tpu.memory_space<vmem>>) attributes {dimension_semantics = [], scalar_prefetch = 0 : i64, scratch_operands = 0 : i64, tpu.core_type = #tpu.core_type<tc>} {
    %c0 = arith.constant 0 : index
    %c0_0 = arith.constant 0 : index
    %0 = vector.load %arg1[%c0, %c0_0] : memref<8x192xf32, #tpu.memory_space<vmem>>, vector<8x192xf32>
    %1 = arith.truncf %0 : vector<8x192xf32> to vector<8x192xbf16>
    %c0_1 = arith.constant 0 : index
    %c0_2 = arith.constant 0 : index
    %2 = vector.load %arg2[%c0_1, %c0_2] : memref<192x128xbf16, #tpu.memory_space<vmem>>, vector<192x128xbf16>
    %cst = arith.constant dense<0.000000e+00> : vector<8x128xf32>
    %3 = tpu.matmul %1, %2, %cst {dimension_numbers = #tpu.dot_dimension_numbers<[1], [0], [0], [1], [0, 0, 1, 1], [], []>} : vector<8x192xbf16>, vector<192x128xbf16>, vector<8x128xf32> -> vector<8x128xf32>
    %c0_3 = arith.constant 0 : index
    %c0_4 = arith.constant 0 : index
    %4 = vector.load %arg3[%c0_3, %c0_4] : memref<1x128xf32, #tpu.memory_space<vmem>>, vector<1x128xf32>
    %5 = vector.broadcast %4 : vector<1x128xf32> to vector<8x128xf32>
    %6 = arith.addf %3, %5 : vector<8x128xf32>
    %7 = arith.mulf %6, %6 : vector<8x128xf32>
    %cst_5 = arith.constant dense<0.000000e+00> : vector<8xf32>
    %8 = vector.multi_reduction <add>, %7, %cst_5 [1] : vector<8x128xf32> to vector<8xf32>
    %9 = vector.shape_cast %8 : vector<8xf32> to vector<8x1xf32>
    %cst_6 = arith.constant 9.99999996E-13 : f32
    %10 = vector.broadcast %cst_6 : f32 to vector<8x1xf32>
    %11 = arith.addf %9, %10 : vector<8x1xf32>
    %12 = math.rsqrt %11 : vector<8x1xf32>
    %13 = vector.broadcast %12 : vector<8x1xf32> to vector<8x128xf32>
    %14 = arith.mulf %6, %13 : vector<8x128xf32>
    %c0_7 = arith.constant 0 : index
    %c0_8 = arith.constant 0 : index
    %15 = vector.load %arg4[%c0_7, %c0_8] : memref<2x128xf32, #tpu.memory_space<vmem>>, vector<2x128xf32>
    %16 = arith.truncf %15 : vector<2x128xf32> to vector<2x128xbf16>
    %c0_9 = arith.constant 0 : index
    %c0_10 = arith.constant 0 : index
    %17 = vector.load %arg5[%c0_9, %c0_10] : memref<128x128xbf16, #tpu.memory_space<vmem>>, vector<128x128xbf16>
    %cst_11 = arith.constant dense<0.000000e+00> : vector<2x128xf32>
    %18 = tpu.matmul %16, %17, %cst_11 {dimension_numbers = #tpu.dot_dimension_numbers<[1], [0], [0], [1], [0, 0, 1, 1], [], []>} : vector<2x128xbf16>, vector<128x128xbf16>, vector<2x128xf32> -> vector<2x128xf32>
    %c0_12 = arith.constant 0 : index
    %c0_13 = arith.constant 0 : index
    %19 = vector.load %arg6[%c0_12, %c0_13] : memref<1x128xf32, #tpu.memory_space<vmem>>, vector<1x128xf32>
    %20 = vector.broadcast %19 : vector<1x128xf32> to vector<2x128xf32>
    %21 = arith.addf %18, %20 : vector<2x128xf32>
    %22 = arith.mulf %21, %21 : vector<2x128xf32>
    %cst_14 = arith.constant dense<0.000000e+00> : vector<2xf32>
    %23 = vector.multi_reduction <add>, %22, %cst_14 [1] : vector<2x128xf32> to vector<2xf32>
    %24 = vector.shape_cast %23 : vector<2xf32> to vector<2x1xf32>
    %cst_15 = arith.constant 9.99999996E-13 : f32
    %25 = vector.broadcast %cst_15 : f32 to vector<2x1xf32>
    %26 = arith.addf %24, %25 : vector<2x1xf32>
    %27 = math.rsqrt %26 : vector<2x1xf32>
    %28 = vector.broadcast %27 : vector<2x1xf32> to vector<2x128xf32>
    %29 = arith.mulf %21, %28 : vector<2x128xf32>
    %c0_16 = arith.constant 0 : index
    %30 = memref.load %arg0[%c0_16] : memref<1xf32, #tpu.memory_space<smem>>
    %31 = vector.broadcast %30 : f32 to vector<2x128xf32>
    %32 = arith.mulf %29, %31 : vector<2x128xf32>
    %33 = vector.shape_cast %32 : vector<2x128xf32> to vector<2x1x128xf32>
    %34 = vector.shape_cast %14 : vector<8x128xf32> to vector<2x4x128xf32>
    %35 = vector.broadcast %33 : vector<2x1x128xf32> to vector<2x4x128xf32>
    %36 = arith.mulf %35, %34 : vector<2x4x128xf32>
    %cst_17 = arith.constant dense<0.000000e+00> : vector<2x4xf32>
    %37 = vector.multi_reduction <add>, %36, %cst_17 [2] : vector<2x4x128xf32> to vector<2x4xf32>
    %c0_18 = arith.constant 0 : index
    %c0_19 = arith.constant 0 : index
    %38 = vector.load %arg7[%c0_18, %c0_19] : memref<2x4xf32, #tpu.memory_space<vmem>>, vector<2x4xf32>
    tpu.vector_store %arg7[%c0_18, %c0_19], %37 {strides = array<i32>} : memref<2x4xf32, #tpu.memory_space<vmem>>, vector<2x4xf32>,
    return
  }
}

</mosaic_0001>

<llo_original>
// kernel: tpu_custom_call.1
$region0: #{tpu_custom_call.1}
  #allocation0 [shape = 'u32[]', space=smem, size = 0x4, offset = 0x4, fixed_abs, tag = 'smem constant byte address 0x4 - core index']
  #allocation1 [shape = 'u32[144,128]{1,0:T(1,128)}', space=vmem, size = 0x12000, scoped, tag = 'internal scratch']
  #allocation2 [shape = 'f32[1]{0:T(128)S(6)}', space=smem, size = 0x200, scoped, tag = 'scoped memory for tpu_custom_call.1']
  %s0 = inlined_call_operand.<no memory space> [shape: f32[1], index: 0, kind: input, shape index: {}]
  %s1 = inlined_call_operand.hbm [shape: f32[8,192], index: 1, kind: input, shape index: {}]
  %s2 = inlined_call_operand.hbm [shape: bf16[192,128], index: 2, kind: input, shape index: {}]
  %s3 = inlined_call_operand.vmem [shape: f32[1,128], index: 3, kind: input, shape index: {}]
  %s4 = inlined_call_operand.vmem [shape: f32[2,128], index: 4, kind: input, shape index: {}]
  %s5 = inlined_call_operand.hbm [shape: bf16[128,128], index: 5, kind: input, shape index: {}]
  %s6 = inlined_call_operand.vmem [shape: f32[1,128], index: 6, kind: input, shape index: {}]
  %s7 = inlined_call_operand.hbm [shape: f32[2,4], index: 7, kind: output, shape index: {}]
  %s8 = sld [smem:[#allocation0]]
  $region50: #{tpu_custom_call.1} parent=0
    _
  %s10 = ssub.s32 1, %s8
  %s11 = scalar_select 0, %s10, %s8
  %12 = sst [smem:[#allocation2]] %s0
  $region1: #{tpu_custom_call.1} parent=0
    #allocation3 [shape = 'u8[8192]{0}', space=vmem, size = 0x2000, scoped, tag = 'input window, operand 1, single buffered']
    #allocation4 [shape = 's32[1]{0}', space=sflag, size = 0x4, scoped, tag = 'scoped memory for tpu_custom_call.1']
    #allocation5 [shape = 's32[1]{0}', space=sflag, size = 0x4, scoped, tag = 'scoped memory for tpu_custom_call.1']
    #allocation6 [shape = 'u8[49152]{0}', space=vmem, size = 0xc000, scoped, tag = 'input window, operand 2, single buffered']
    #allocation7 [shape = 's32[1]{0}', space=sflag, size = 0x4, scoped, tag = 'scoped memory for tpu_custom_call.1']
    #allocation8 [shape = 'u8[32768]{0}', space=vmem, size = 0x8000, scoped, tag = 'input window, operand 5, single buffered']
    #allocation9 [shape = 'u8[1024]{0}', space=vmem, size = 0x400, scoped, tag = 'output window, operand 0, single buffered']
    %13 = vsyncpa [#allocation4], 0
    %14 = vsyncpa [#allocation7], 0
    %15 = vsyncpa [#allocation5], 0
    // Predicated region
    $region2: #{tpu_custom_call.1} parent=1 // pred_check
      _
    $region3: #{tpu_custom_call.1} parent=1 // pred_check_branch
      %17 = sbr.rel (0) target = $region5
    $region4: #{tpu_custom_call.1} parent=1 // pred_region
      _
    $region5: #{tpu_custom_call.1} parent=1 // pred_fallthru
      _
    // Predicated region
    $region6: #{tpu_custom_call.1} parent=1 // pred_check
      _
    $region7: #{tpu_custom_call.1} parent=1 // pred_check_branch
      %19 = sbr.rel (0) target = $region9
    $region8: #{tpu_custom_call.1} parent=1 // pred_region
      %s21 = ssub.s32 256, 256
      %22 = vsyncadd [#allocation4], %s21
      %s24 = sshll.u32 [#allocation3], 4
      %s25 = int_to_ptr.vmem [resolvable:$true] %s24
      %27 = dma.hbm_to_vmem [thread:$0]  %s1, 256, %s25, [#allocation4]
    $region9: #{tpu_custom_call.1} parent=1 // pred_fallthru
      _
    // Predicated region
    $region10: #{tpu_custom_call.1} parent=1 // pred_check
      _
    $region11: #{tpu_custom_call.1} parent=1 // pred_check_branch
      %29 = sbr.rel (0) target = $region13
    $region12: #{tpu_custom_call.1} parent=1 // pred_region
      %s31 = ssub.s32 1536, 1536
      %32 = vsyncadd [#allocation7], %s31
      %s33 = sshll.u32 [#allocation6], 4
      %s34 = int_to_ptr.vmem [resolvable:$true] %s33
      %39 = dma.hbm_to_vmem [thread:$0]  %s2, 1536, %s34, [#allocation7], 64, 64, 4
    $region13: #{tpu_custom_call.1} parent=1 // pred_fallthru
      _
    // Predicated region
    $region14: #{tpu_custom_call.1} parent=1 // pred_check
      _
    $region15: #{tpu_custom_call.1} parent=1 // pred_check_branch
      %41 = sbr.rel (0) target = $region17
    $region16: #{tpu_custom_call.1} parent=1 // pred_region
      _
    $region17: #{tpu_custom_call.1} parent=1 // pred_fallthru
      _
    // Predicated region
    $region18: #{tpu_custom_call.1} parent=1 // pred_check
      _
    $region19: #{tpu_custom_call.1} parent=1 // pred_check_branch
      %43 = sbr.rel (0) target = $region21
    $region20: #{tpu_custom_call.1} parent=1 // pred_region
      _
    $region21: #{tpu_custom_call.1} parent=1 // pred_fallthru
      _
    // Predicated region
    $region22: #{tpu_custom_call.1} parent=1 // pred_check
      _
    $region23: #{tpu_custom_call.1} parent=1 // pred_check_branch
      %45 = sbr.rel (0) target = $region25
    $region24: #{tpu_custom_call.1} parent=1 // pred_region
      %s47 = ssub.s32 1024, 1024
      %48 = vsyncadd [#allocation7], %s47
      %s49 = sshll.u32 [#allocation8], 4
      %s50 = int_to_ptr.vmem [resolvable:$true] %s49
      %55 = dma.hbm_to_vmem [thread:$0]  %s5, 1024, %s50, [#allocation7], 64, 64, 4
    $region25: #{tpu_custom_call.1} parent=1 // pred_fallthru
      _
    // Predicated region
    $region26: #{tpu_custom_call.1} parent=1 // pred_check
      _
    $region27: #{tpu_custom_call.1} parent=1 // pred_check_branch
      %57 = sbr.rel (0) target = $region29
    $region28: #{tpu_custom_call.1} parent=1 // pred_region
      _
    $region29: #{tpu_custom_call.1} parent=1 // pred_fallthru
      _
    // Predicated region
    $region30: #{tpu_custom_call.1} parent=1 // pred_check
      _
    $region31: #{tpu_custom_call.1} parent=1 // pred_check_branch
      %59 = sbr.rel (0) target = $region33
    $region32: #{tpu_custom_call.1} parent=1 // pred_region
      %60 = dma.done [#allocation4], 256
    $region33: #{tpu_custom_call.1} parent=1 // pred_fallthru
      _
    // Predicated region
    $region34: #{tpu_custom_call.1} parent=1 // pred_check
      _
    $region35: #{tpu_custom_call.1} parent=1 // pred_check_branch
      %62 = sbr.rel (0) target = $region37
    $region36: #{tpu_custom_call.1} parent=1 // pred_region
      %63 = dma.done [#allocation7], 1536
    $region37: #{tpu_custom_call.1} parent=1 // pred_fallthru
      _
    // Predicated region
    $region38: #{tpu_custom_call.1} parent=1 // pred_check
      _
    $region39: #{tpu_custom_call.1} parent=1 // pred_check_branch
      %65 = sbr.rel (0) target = $region41
    $region40: #{tpu_custom_call.1} parent=1 // pred_region
      %66 = dma.done [#allocation7], 1024
    $region41: #{tpu_custom_call.1} parent=1 // pred_fallthru
      _
    %v68 = vld [vmem:[#allocation3] sm:$0xff]
    %v69 = vld [vmem:[#allocation3 + $0x8] sm:$0xff]
    %v70 = vpack.c.bf16 %v68, %v68
    %v71 = vpack.c.bf16 %v69, %v69
    %v72 = vld [vmem:[#allocation6] sm:$0xf]
    %v73 = vld [vmem:[#allocation6 + $0x4] sm:$0xf]
    %v74 = vld [vmem:[#allocation6 + $0x8] sm:$0xf]
    %v75 = vld [vmem:[#allocation6 + $0xc] sm:$0xf]
    %v76 = vld [vmem:[#allocation6 + $0x10] sm:$0xf]
    %v77 = vld [vmem:[#allocation6 + $0x14] sm:$0xf]
    %v78 = vld [vmem:[#allocation6 + $0x18] sm:$0xf]
    %v79 = vld [vmem:[#allocation6 + $0x1c] sm:$0xf]
    %v80 = vld [vmem:[#allocation6 + $0x20] sm:$0xf]
    %v81 = vld [vmem:[#allocation6 + $0x24] sm:$0xf]
    %v82 = vld [vmem:[#allocation6 + $0x28] sm:$0xf]
    %v83 = vld [vmem:[#allocation6 + $0x2c] sm:$0xf]
    %v84 = vld [vmem:[#allocation6 + $0x30] sm:$0xf]
    %v85 = vld [vmem:[#allocation6 + $0x34] sm:$0xf]
    %v86 = vld [vmem:[#allocation6 + $0x38] sm:$0xf]
    %v87 = vld [vmem:[#allocation6 + $0x3c] sm:$0xf]
    %v88 = vld [vmem:[#allocation6 + $0x40] sm:$0xf]
    %v89 = vld [vmem:[#allocation6 + $0x44] sm:$0xf]
    %v90 = vld [vmem:[#allocation6 + $0x48] sm:$0xf]
    %v91 = vld [vmem:[#allocation6 + $0x4c] sm:$0xf]
    %v92 = vld [vmem:[#allocation6 + $0x50] sm:$0xf]
    %v93 = vld [vmem:[#allocation6 + $0x54] sm:$0xf]
    %v94 = vld [vmem:[#allocation6 + $0x58] sm:$0xf]
    %v95 = vld [vmem:[#allocation6 + $0x5c] sm:$0xf]
    %v96 = vld [vmem:[%s3] sm:$0x1]
    %v98 = vlaneseq
    %v99 = vshrl.u32 %v98, 7
    %v100 = vsub.s32 0, %v99
    %v101 = vrot.slane %v96, %v100
    %v127 = vunpack.c.l.b16 %v72
    %v128 = vunpack.c.l.b16 %v73
    %v129 = vunpack.c.l.b16 %v74
    %v130 = vunpack.c.l.b16 %v75
    %v131 = vunpack.c.l.b16 %v76
    %v132 = vunpack.c.l.b16 %v77
    %v133 = vunpack.c.l.b16 %v78
    %v134 = vunpack.c.l.b16 %v79
    %v135 = vunpack.c.l.b16 %v80
    %v136 = vunpack.c.l.b16 %v81
    %v137 = vunpack.c.l.b16 %v82
    %v138 = vunpack.c.l.b16 %v83
    %v139 = vunpack.c.l.b16 %v84
    %v140 = vunpack.c.l.b16 %v85
    %v141 = vunpack.c.l.b16 %v86
    %v142 = vunpack.c.l.b16 %v87
    %v143 = vunpack.c.l.b16 %v88
    %v144 = vunpack.c.l.b16 %v89
    %v145 = vunpack.c.l.b16 %v90
    %v146 = vunpack.c.l.b16 %v91
    %v147 = vunpack.c.l.b16 %v92
    %v148 = vunpack.c.l.b16 %v93
    %v149 = vunpack.c.l.b16 %v94
    %v150 = vunpack.c.l.b16 %v95
    %v151 = vpack.c.b16 %v128, %v127
    %v152 = vpack.c.b16 %v130, %v129
    %v153 = vpack.c.b16 %v132, %v131
    %v154 = vpack.c.b16 %v134, %v133
    %v155 = vpack.c.b16 %v136, %v135
    %v156 = vpack.c.b16 %v138, %v137
    %v157 = vpack.c.b16 %v140, %v139
    %v158 = vpack.c.b16 %v142, %v141
    %v159 = vpack.c.b16 %v144, %v143
    %v160 = vpack.c.b16 %v146, %v145
    %v161 = vpack.c.b16 %v148, %v147
    %v162 = vpack.c.b16 %v150, %v149
    %vm175 = vcmask 523264
    %v177 = vsel %vm175, %v71, 0
    %179 = vmatprep.subr.bf16.mxu0 0
    %180 = vmatpush1.bf16.msra.mxu0 %v151
    %181 = vmatprep.subr.bf16.mxu0 0
    %182 = vmatpush1.bf16.msra.mxu0 %v152
    %183 = vmatprep.subr.bf16.mxu0 0
    %184 = vmatpush1.bf16.msra.mxu0 %v153
    %185 = vmatprep.subr.bf16.mxu0 0
    %186 = vmatpush1.bf16.msra.mxu0 %v154
    %187 = vmatprep.subr.bf16.mxu0 0
    %188 = vmatpush1.bf16.msra.mxu0 %v155
    %189 = vmatprep.subr.bf16.mxu0 0
    %190 = vmatpush1.bf16.msra.mxu0 %v156
    %191 = vmatprep.subr.bf16.mxu0 0
    %192 = vmatpush1.bf16.msra.mxu0 %v157
    %193 = vmatprep.subr.bf16.mxu0 0
    %194 = vmatpush1.bf16.msra.mxu0 %v158
    %195 = vmatprep.subr.bf16.mxu0 0
    %196 = vmatpush1.bf16.msra.mxu0 %v159
    %197 = vmatprep.subr.bf16.mxu0 0
    %198 = vmatpush1.bf16.msra.mxu0 %v160
    %199 = vmatprep.subr.bf16.mxu0 0
    %200 = vmatpush1.bf16.msra.mxu0 %v161
    %201 = vmatprep.subr.bf16.mxu0 0
    %202 = vmatpush1.bf16.msra.mxu0 %v162
    %203 = vmatprep.subr.bf16.mxu0 0
    %204 = vmatpush1.bf16.msra.mxu0 0
    %205 = vmatprep.subr.bf16.mxu0 0
    %206 = vmatpush1.bf16.msra.mxu0 0
    %207 = vmatprep.subr.bf16.mxu0 0
    %208 = vmatpush1.bf16.msra.mxu0 0
    %209 = vmatprep.subr.bf16.mxu0 0
    %210 = vmatpush1.bf16.msra.mxu0 0
    %211 = vmatprep.mubr.bf16.mxu0 %v177
    %212 = vmatmul.mubr.bf16.gmra.mrb[0].mxu0 %v70
    %v213 = vpop.f32.mrb[0].mxu0
    %v214 = vadd.f32 %v101, %v213
    %v215 = vpop.f32.mrb[0].mxu0
    %v216 = vpop.f32.mrb[0].mxu0
    %v217 = vpop.f32.mrb[0].mxu0
    %218 = vdwg.mxu0
    %v219 = vmul.f32 %v214, %v214
    %220 = vadd.xlane.f32.xlu0 %v219
    %v221 = vpop.xlane.xlu0 %220
    %v222 = vadd.f32 %v221, 1e-12
    %v223 = vrsqrt.pop %v222
    %v224 = vmul.f32 %v214, %v223
    %v225 = vld [vmem:[%s4] sm:$0x3]
    %v226 = vpack.c.bf16 %v225, %v225
    %v227 = vld [vmem:[#allocation8] sm:$0xf]
    %v228 = vld [vmem:[#allocation8 + $0x4] sm:$0xf]
    %v229 = vld [vmem:[#allocation8 + $0x8] sm:$0xf]
    %v230 = vld [vmem:[#allocation8 + $0xc] sm:$0xf]
    %v231 = vld [vmem:[#allocation8 + $0x10] sm:$0xf]
    %v232 = vld [vmem:[#allocation8 + $0x14] sm:$0xf]
    %v233 = vld [vmem:[#allocation8 + $0x18] sm:$0xf]
    %v234 = vld [vmem:[#allocation8 + $0x1c] sm:$0xf]
    %v235 = vld [vmem:[#allocation8 + $0x20] sm:$0xf]
    %v236 = vld [vmem:[#allocation8 + $0x24] sm:$0xf]
    %v237 = vld [vmem:[#allocation8 + $0x28] sm:$0xf]
    %v238 = vld [vmem:[#allocation8 + $0x2c] sm:$0xf]
    %v239 = vld [vmem:[#allocation8 + $0x30] sm:$0xf]
    %v240 = vld [vmem:[#allocation8 + $0x34] sm:$0xf]
    %v241 = vld [vmem:[#allocation8 + $0x38] sm:$0xf]
    %v242 = vld [vmem:[#allocation8 + $0x3c] sm:$0xf]
    %v243 = vld [vmem:[%s6] sm:$0x1]
    %v245 = vlaneseq
    %v246 = vshrl.u32 %v245, 7
    %v247 = vsub.s32 0, %v246
    %v248 = vrot.slane %v243, %v247
    %v266 = vunpack.c.l.b16 %v227
    %v267 = vunpack.c.l.b16 %v228
    %v268 = vunpack.c.l.b16 %v229
    %v269 = vunpack.c.l.b16 %v230
    %v270 = vunpack.c.l.b16 %v231
    %v271 = vunpack.c.l.b16 %v232
    %v272 = vunpack.c.l.b16 %v233
    %v273 = vunpack.c.l.b16 %v234
    %v274 = vunpack.c.l.b16 %v235
    %v275 = vunpack.c.l.b16 %v236
    %v276 = vunpack.c.l.b16 %v237
    %v277 = vunpack.c.l.b16 %v238
    %v278 = vunpack.c.l.b16 %v239
    %v279 = vunpack.c.l.b16 %v240
    %v280 = vunpack.c.l.b16 %v241
    %v281 = vunpack.c.l.b16 %v242
    %v282 = vpack.c.b16 %v267, %v266
    %v283 = vpack.c.b16 %v269, %v268
    %v284 = vpack.c.b16 %v271, %v270
    %v285 = vpack.c.b16 %v273, %v272
    %v286 = vpack.c.b16 %v275, %v274
    %v287 = vpack.c.b16 %v277, %v276
    %v288 = vpack.c.b16 %v279, %v278
    %v289 = vpack.c.b16 %v281, %v280
    %298 = vmatprep.subr.bf16.mxu0 0
    %299 = vmatpush1.bf16.msra.mxu0 %v282
    %300 = vmatprep.subr.bf16.mxu0 0
    %301 = vmatpush1.bf16.msra.mxu0 %v283
    %302 = vmatprep.subr.bf16.mxu0 0
    %303 = vmatpush1.bf16.msra.mxu0 %v284
    %304 = vmatprep.subr.bf16.mxu0 0
    %305 = vmatpush1.bf16.msra.mxu0 %v285
    %306 = vmatprep.subr.bf16.mxu0 0
    %307 = vmatpush1.bf16.msra.mxu0 %v286
    %308 = vmatprep.subr.bf16.mxu0 0
    %309 = vmatpush1.bf16.msra.mxu0 %v287
    %310 = vmatprep.subr.bf16.mxu0 0
    %311 = vmatpush1.bf16.msra.mxu0 %v288
    %312 = vmatprep.subr.bf16.mxu0 0
    %313 = vmatpush1.bf16.msra.mxu0 %v289
    %314 = vmatprep.subr.bf16.mxu0 0
    %315 = vmatpush1.bf16.msra.mxu0 0
    %316 = vmatprep.subr.bf16.mxu0 0
    %317 = vmatpush1.bf16.msra.mxu0 0
    %318 = vmatprep.subr.bf16.mxu0 0
    %319 = vmatpush1.bf16.msra.mxu0 0
    %320 = vmatprep.subr.bf16.mxu0 0
    %321 = vmatpush1.bf16.msra.mxu0 0
    %322 = vmatprep.subr.bf16.mxu0 0
    %323 = vmatpush1.bf16.msra.mxu0 0
    %324 = vmatprep.subr.bf16.mxu0 0
    %325 = vmatpush1.bf16.msra.mxu0 0
    %326 = vmatprep.subr.bf16.mxu0 0
    %327 = vmatpush1.bf16.msra.mxu0 0
    %328 = vmatprep.subr.bf16.mxu0 0
    %329 = vmatpush1.bf16.msra.mxu0 0
    %330 = vmatprep.mubr.bf16.mxu0 0
    %331 = vmatmul.mubr.bf16.gmra.mrb[0].mxu0 %v226
    %v332 = vpop.f32.mrb[0].mxu0
    %v333 = vadd.f32 %v248, %v332
    %v334 = vpop.f32.mrb[0].mxu0
    %v335 = vpop.f32.mrb[0].mxu0
    %v336 = vpop.f32.mrb[0].mxu0
    %337 = vdwg.mxu0
    %v338 = vmul.f32 %v333, %v333
    %vm339 = vcmask 1041408
    %v340 = vsel %vm339, %v338, 0.0
    %341 = vadd.xlane.f32.xlu0 %v340
    %v342 = vpop.xlane.xlu0 %341
    %v343 = vadd.f32 %v342, 1e-12
    %v344 = vrsqrt.pop %v343
    %v345 = vmul.f32 %v333, %v344
    %s346 = sld [smem:[#allocation2]]
    %v347 = vstv %s346
    %v348 = vmul.f32 %v345, %v347
    %v351 = vunpack.c.l.s4 1966171168
    %v352 = vunpack.c.0.s8 %v351
    %v353 = vlaneseq
    %v354 = vshrl.u32 %v353, 7
    %v355 = vsub.s32 %v352, %v354
    %v356 = vrot.slane %v348, %v355
    %v357 = vcombine.high %v356, %v356
    %v359 = vunpack.c.l.s4 1966171168
    %v360 = vunpack.c.0.s8 %v359
    %v361 = vlaneseq
    %v362 = vshrl.u32 %v361, 7
    %v363 = vsub.s32 %v360, %v362
    %v364 = vrot.slane %v356, %v363
    %v366 = vunpack.c.l.s4 1966171168
    %v367 = vunpack.c.0.s8 %v366
    %v368 = vlaneseq
    %v369 = vshrl.u32 %v368, 7
    %v370 = vsub.s32 %v367, %v369
    %v371 = vrot.slane %v357, %v370
    %v373 = vcombine.high %v224, %v224
    %v375 = vlaneseq
    %v376 = vshrl.u32 %v375, 7
    %v377 = vsub.s32 0, %v376
    %v378 = vrot.slane %v364, %v377
    %v379 = vlaneseq
    %v380 = vshrl.u32 %v379, 7
    %v381 = vsub.s32 0, %v380
    %v382 = vrot.slane %v371, %v381
    %v385 = vmul.f32 %v378, %v224
    %v386 = vmul.f32 %v382, %v373
    %vm387 = vcmask 1043456
    %v388 = vsel %vm387, %v385, 0.0
    %389 = vadd.xlane.f32.xlu0 %v388
    %v390 = vpop.xlane.xlu0 %389
    %v391 = vsel %vm387, %v386, 0.0
    %392 = vadd.xlane.f32.xlu0 %v391
    %v393 = vpop.xlane.xlu0 %392
    %v396 = vlaneseq
    %v397 = vand.u32 %v396, 127
    %v398 = vlaneseq
    %v399 = vshrl.u32 %v398, 7
    %v400 = vsub.s32 %v397, %v399
    %v401 = vrot.slane %v390, %v400
    %v402 = vlaneseq
    %v403 = vshrl.u32 %v402, 7
    %v404 = vsub.s32 %v397, %v403
    %v405 = vrot.slane %v393, %v404
    %vm406 = vcmask 1041409
    %v407 = vsel %vm406, %v405, %v401
    %vm409 = vcmask 25600
    %410 = vst.msk [vmem:[#allocation9] sm:$0x3] %vm409, %v407
    // Predicated region
    $region42: #{tpu_custom_call.1} parent=1 // pred_check
      _
    $region43: #{tpu_custom_call.1} parent=1 // pred_check_branch
      %412 = sbr.rel (0) target = $region45
    $region44: #{tpu_custom_call.1} parent=1 // pred_region
      %s414 = ssub.s32 32, 32
      %415 = vsyncadd [#allocation5], %s414
      %s417 = sshll.u32 [#allocation9], 4
      %s418 = int_to_ptr.vmem [resolvable:$true] %s417
      %420 = dma.vmem_to_hbm [thread:$0]  %s418, 32, %s7, [#allocation5]
    $region45: #{tpu_custom_call.1} parent=1 // pred_fallthru
      _
    // Predicated region
    $region46: #{tpu_custom_call.1} parent=1 // pred_check
      _
    $region47: #{tpu_custom_call.1} parent=1 // pred_check_branch
      %422 = sbr.rel (0) target = $region49
    $region48: #{tpu_custom_call.1} parent=1 // pred_region
      %423 = dma.done [#allocation5], 32
    $region49: #{tpu_custom_call.1} parent=1 // pred_fallthru
      _
    %424 = vsyncpa [#allocation4], 1
    %425 = vsyncpa [#allocation7], 1
    %426 = vsyncpa [#allocation5], 1

</llo_original>
